<compile_context>
chip_gen: v6e
topology: v6e:2x2x1
jax: 0.10.0
libtpu: 0.0.40
codegen_flags: <defaults>
</compile_context>

<pallas_src>
import jax
import jax.numpy as jnp
from jax.experimental import pallas as pl
from jax.experimental.pallas import tpu as pltpu


def _round_up(x, m):
    return (x + m - 1) // m * m


def _ae_kernel(x_ref, w1_ref, b1_ref, w23_ref, b23_ref, w4_ref, b4_ref, o_ref):
    wdt = w1_ref.dtype
    # encoder layer 1 + ReLU
    h = jnp.dot(x_ref[...], w1_ref[...],
                preferred_element_type=jnp.float32) + b1_ref[...]
    h = jnp.maximum(h, 0.0)
    # fused (encoder layer 2 @ decoder layer 1) -- no ReLU between them -- then ReLU
    d = jnp.dot(h.astype(wdt), w23_ref[...],
                preferred_element_type=jnp.float32) + b23_ref[...]
    d = jnp.maximum(d, 0.0)
    # decoder layer 2
    out = jnp.dot(d.astype(wdt), w4_ref[...],
                  preferred_element_type=jnp.float32) + b4_ref[...]
    o_ref[...] = out.astype(o_ref.dtype)


def autoencoder_forward(x, params, *, tm=None, compute_dtype=None):
    """x: (B, D) float32.  params: dict of weights/biases (see init_params).

    tm: batch-tile rows per grid step (multiple of 8, <= 512).  Default picks
        min(512, round_up(B, 8)).
    compute_dtype: dtype for x / weights fed to the MXU (e.g. jnp.bfloat16 on
        v6e/v7x).  Accumulation, bias add and ReLU stay f32; output is x.dtype.
    """
    B, D = x.shape
    f32 = jnp.float32
    hi = jax.lax.Precision.HIGHEST

    w1, b1 = params["w1"].astype(f32), params["b1"].astype(f32)   # (D,256), (1,256)
    w2, b2 = params["w2"].astype(f32), params["b2"].astype(f32)   # (256,128), (1,128)
    w3, b3 = params["w3"].astype(f32), params["b3"].astype(f32)   # (128,256), (1,256)
    w4, b4 = params["w4"].astype(f32), params["b4"].astype(f32)   # (256,D), (1,D)

    # Algebraic fusion of the ReLU-free 256->128->256 middle into one 256x256 matmul.
    w23 = jnp.dot(w2, w3, precision=hi)                       # (256, 256)
    b23 = jnp.dot(b2, w3, precision=hi) + b3                  # (1, 256)

    if compute_dtype is None:
        compute_dtype = x.dtype
    x_in = x.astype(compute_dtype)
    w1c = w1.astype(compute_dtype)
    w23c = w23.astype(compute_dtype)
    w4c = w4.astype(compute_dtype)

    # Batch tiling: big tiles for MXU occupancy, capped at 512 rows so the
    # double-buffered x/out tiles + resident weights + f32 intermediates fit the
    # default scoped VMEM on v5e (16 MiB) and v7x (32 of 64 MiB).
    if tm is None:
        tm = min(512, _round_up(B, 8))
    tm = _round_up(max(8, min(int(tm), 512)), 8)
    B_pad = _round_up(B, tm)
    if B_pad != B:
        x_in = jnp.pad(x_in, ((0, B_pad - B), (0, 0)))
    grid = (B_pad // tm,)

    def const_spec(arr):
        # whole-array block, constant block index across the batch grid axis
        # (Pallas keeps it resident; no re-DMA per step).
        return pl.BlockSpec(arr.shape, lambda i, _a=arr: (0,) * _a.ndim)

    flops = 2 * B_pad * (D * 256 + 256 * 256 + 256 * D)
    bytes_accessed = int(
        x_in.size * x_in.dtype.itemsize
        + B_pad * D * x.dtype.itemsize
        + sum(int(a.size) * a.dtype.itemsize
              for a in (w1c, w23c, w4c, b1, b23, b4)))

    out = pl.pallas_call(
        _ae_kernel,
        out_shape=jax.ShapeDtypeStruct((B_pad, D), x.dtype),
        grid_spec=pl.GridSpec(
            grid=grid,
            in_specs=[
                pl.BlockSpec((tm, D), lambda i: (i, 0)),   # x tile
                const_spec(w1c), const_spec(b1),
                const_spec(w23c), const_spec(b23),
                const_spec(w4c), const_spec(b4),
            ],
            out_specs=pl.BlockSpec((tm, D), lambda i: (i, 0)),
        ),
        compiler_params=pltpu.CompilerParams(
            dimension_semantics=("parallel",)),
        cost_estimate=pl.CostEstimate(
            flops=flops, transcendentals=0, bytes_accessed=bytes_accessed),
    )(x_in, w1c, b1, w23c, b23, w4c, b4)

    return out[:B]


def init_params(key, input_dim):
    """Deterministic parameter init mimicking nn.Linear (uniform +-1/sqrt(fan_in))."""
    dims = [(input_dim, 256), (256, 128), (128, 256), (256, input_dim)]
    params = {}
    for idx, (fan_in, fan_out) in enumerate(dims, start=1):
        key, kw, kb = jax.random.split(key, 3)
        bound = 1.0 / jnp.sqrt(jnp.float32(fan_in))
        params[f"w{idx}"] = jax.random.uniform(
            kw, (fan_in, fan_out), jnp.float32, -bound, bound)
        params[f"b{idx}"] = jax.random.uniform(
            kb, (1, fan_out), jnp.float32, -bound, bound)
    return params


def _reference(x, p):
    h = jnp.maximum(x @ p["w1"] + p["b1"], 0.0)
    z = h @ p["w2"] + p["b2"]
    d = jnp.maximum(z @ p["w3"] + p["b3"], 0.0)
    return d @ p["w4"] + p["b4"]


if __name__ == "__main__":
    INPUT_DIM = 512
    BATCH = 8

    key = jax.random.PRNGKey(0)
    key, kx = jax.random.split(key)
    x = jax.random.normal(kx, (BATCH, INPUT_DIM), jnp.float32)
    params = init_params(key, INPUT_DIM)

    ref = _reference(x, params)

    # 1) f32 path, tiny batch -> single grid step (whole batch as one block).
    out = jax.block_until_ready(autoencoder_forward(x, params))
    assert out.shape == (BATCH, INPUT_DIM)
    assert jnp.allclose(out, ref, atol=1e-2, rtol=1e-2), "f32 mismatch vs reference"

    # 2) Tiled path: batch not a multiple of the tile, forced tm=128 -> 3 grid steps
    #    (exercises padding + the "parallel" batch axis).
    xb = jax.random.normal(jax.random.PRNGKey(1), (300, INPUT_DIM), jnp.float32)
    out_b = jax.block_until_ready(autoencoder_forward(xb, params, tm=128))
    ref_b = _reference(xb, params)
    assert out_b.shape == (300, INPUT_DIM)
    assert jnp.allclose(out_b, ref_b, atol=1e-2, rtol=1e-2), "tiled f32 mismatch"

    # 3) bf16 compute path (v6e/v7x bf16 MXU); f32 accumulation, looser tolerance.
    out_bf16 = jax.block_until_ready(
        autoencoder_forward(x, params, compute_dtype=jnp.bfloat16))
    assert out_bf16.shape == (BATCH, INPUT_DIM)
    assert jnp.allclose(out_bf16, ref, atol=0.15, rtol=0.1), "bf16 mismatch"

    print("KERNEL_OK")
</pallas_src>

<mosaic_0001>
module attributes {stable_mosaic.version = 11 : i64} {
  func.func @_ae_kernel(%arg0: i32, %arg1: memref<8x512xf32, #tpu.memory_space<vmem>>, %arg2: memref<512x256xf32, #tpu.memory_space<vmem>>, %arg3: memref<1x256xf32, #tpu.memory_space<vmem>>, %arg4: memref<256x256xf32, #tpu.memory_space<vmem>>, %arg5: memref<1x256xf32, #tpu.memory_space<vmem>>, %arg6: memref<256x512xf32, #tpu.memory_space<vmem>>, %arg7: memref<1x512xf32, #tpu.memory_space<vmem>>, %arg8: memref<8x512xf32, #tpu.memory_space<vmem>>) attributes {dimension_semantics = [#tpu.dimension_semantics<parallel>], iteration_bounds = array<i64: 1>, scalar_prefetch = 0 : i64, scratch_operands = 0 : i64, tpu.core_type = #tpu.core_type<tc>, window_params = [{transform_indices = @transform_0, window_bounds = array<i64: 8, 512>}, {pipeline_mode = #tpu.pipeline_mode<synchronous>, transform_indices = @transform_1, window_bounds = array<i64: 512, 256>}, {pipeline_mode = #tpu.pipeline_mode<synchronous>, transform_indices = @transform_2, window_bounds = array<i64: 1, 256>}, {pipeline_mode = #tpu.pipeline_mode<synchronous>, transform_indices = @transform_3, window_bounds = array<i64: 256, 256>}, {pipeline_mode = #tpu.pipeline_mode<synchronous>, transform_indices = @transform_4, window_bounds = array<i64: 1, 256>}, {pipeline_mode = #tpu.pipeline_mode<synchronous>, transform_indices = @transform_5, window_bounds = array<i64: 256, 512>}, {pipeline_mode = #tpu.pipeline_mode<synchronous>, transform_indices = @transform_6, window_bounds = array<i64: 1, 512>}, {transform_indices = @transform_7, window_bounds = array<i64: 8, 512>}]} {
    %c0 = arith.constant 0 : index
    %c0_0 = arith.constant 0 : index
    %0 = vector.load %arg1[%c0, %c0_0] : memref<8x512xf32, #tpu.memory_space<vmem>>, vector<8x512xf32>
    %c0_1 = arith.constant 0 : index
    %c0_2 = arith.constant 0 : index
    %1 = vector.load %arg2[%c0_1, %c0_2] : memref<512x256xf32, #tpu.memory_space<vmem>>, vector<512x256xf32>
    %cst = arith.constant dense<0.000000e+00> : vector<8x256xf32>
    %2 = tpu.matmul %0, %1, %cst {dimension_numbers = #tpu.dot_dimension_numbers<[1], [0], [0], [1], [0, 0, 1, 1], [], []>} : vector<8x512xf32>, vector<512x256xf32>, vector<8x256xf32> -> vector<8x256xf32>
    %c0_3 = arith.constant 0 : index
    %c0_4 = arith.constant 0 : index
    %3 = vector.load %arg3[%c0_3, %c0_4] : memref<1x256xf32, #tpu.memory_space<vmem>>, vector<1x256xf32>
    %4 = vector.broadcast %3 : vector<1x256xf32> to vector<8x256xf32>
    %5 = arith.addf %2, %4 : vector<8x256xf32>
    %cst_5 = arith.constant 0.000000e+00 : f32
    %6 = vector.broadcast %cst_5 : f32 to vector<8x256xf32>
    %7 = arith.maximumf %5, %6 : vector<8x256xf32>
    %c0_6 = arith.constant 0 : index
    %c0_7 = arith.constant 0 : index
    %8 = vector.load %arg4[%c0_6, %c0_7] : memref<256x256xf32, #tpu.memory_space<vmem>>, vector<256x256xf32>
    %cst_8 = arith.constant dense<0.000000e+00> : vector<8x256xf32>
    %9 = tpu.matmul %7, %8, %cst_8 {dimension_numbers = #tpu.dot_dimension_numbers<[1], [0], [0], [1], [0, 0, 1, 1], [], []>} : vector<8x256xf32>, vector<256x256xf32>, vector<8x256xf32> -> vector<8x256xf32>
    %c0_9 = arith.constant 0 : index
    %c0_10 = arith.constant 0 : index
    %10 = vector.load %arg5[%c0_9, %c0_10] : memref<1x256xf32, #tpu.memory_space<vmem>>, vector<1x256xf32>
    %11 = vector.broadcast %10 : vector<1x256xf32> to vector<8x256xf32>
    %12 = arith.addf %9, %11 : vector<8x256xf32>
    %cst_11 = arith.constant 0.000000e+00 : f32
    %13 = vector.broadcast %cst_11 : f32 to vector<8x256xf32>
    %14 = arith.maximumf %12, %13 : vector<8x256xf32>
    %c0_12 = arith.constant 0 : index
    %c0_13 = arith.constant 0 : index
    %15 = vector.load %arg6[%c0_12, %c0_13] : memref<256x512xf32, #tpu.memory_space<vmem>>, vector<256x512xf32>
    %cst_14 = arith.constant dense<0.000000e+00> : vector<8x512xf32>
    %16 = tpu.matmul %14, %15, %cst_14 {dimension_numbers = #tpu.dot_dimension_numbers<[1], [0], [0], [1], [0, 0, 1, 1], [], []>} : vector<8x256xf32>, vector<256x512xf32>, vector<8x512xf32> -> vector<8x512xf32>
    %c0_15 = arith.constant 0 : index
    %c0_16 = arith.constant 0 : index
    %17 = vector.load %arg7[%c0_15, %c0_16] : memref<1x512xf32, #tpu.memory_space<vmem>>, vector<1x512xf32>
    %18 = vector.broadcast %17 : vector<1x512xf32> to vector<8x512xf32>
    %19 = arith.addf %16, %18 : vector<8x512xf32>
    %c0_17 = arith.constant 0 : index
    %c0_18 = arith.constant 0 : index
    %20 = vector.load %arg8[%c0_17, %c0_18] : memref<8x512xf32, #tpu.memory_space<vmem>>, vector<8x512xf32>
    tpu.vector_store %arg8[%c0_17, %c0_18], %19 {strides = array<i32>} : memref<8x512xf32, #tpu.memory_space<vmem>>, vector<8x512xf32>,
    return
  }
  func.func @transform_0(%arg0: i32) -> (i32, i32) {
    %c0_i32 = arith.constant 0 : i32
    %c0_i32_0 = arith.constant 0 : i32
    return %arg0, %c0_i32 : i32, i32
  }
  func.func @transform_1(%arg0: i32) -> (i32, i32) {
    %c0_i32 = arith.constant 0 : i32
    %c0_i32_0 = arith.constant 0 : i32
    %c0_i32_1 = arith.constant 0 : i32
    return %c0_i32, %c0_i32_0 : i32, i32
  }
  func.func @transform_2(%arg0: i32) -> (i32, i32) {
    %c0_i32 = arith.constant 0 : i32
    %c0_i32_0 = arith.constant 0 : i32
    %c0_i32_1 = arith.constant 0 : i32
    return %c0_i32, %c0_i32_0 : i32, i32
  }
  func.func @transform_3(%arg0: i32) -> (i32, i32) {
    %c0_i32 = arith.constant 0 : i32
    %c0_i32_0 = arith.constant 0 : i32
    %c0_i32_1 = arith.constant 0 : i32
    return %c0_i32, %c0_i32_0 : i32, i32
  }
  func.func @transform_4(%arg0: i32) -> (i32, i32) {
    %c0_i32 = arith.constant 0 : i32
    %c0_i32_0 = arith.constant 0 : i32
    %c0_i32_1 = arith.constant 0 : i32
    return %c0_i32, %c0_i32_0 : i32, i32
  }
  func.func @transform_5(%arg0: i32) -> (i32, i32) {
    %c0_i32 = arith.constant 0 : i32
    %c0_i32_0 = arith.constant 0 : i32
    %c0_i32_1 = arith.constant 0 : i32
    return %c0_i32, %c0_i32_0 : i32, i32
  }
  func.func @transform_6(%arg0: i32) -> (i32, i32) {
    %c0_i32 = arith.constant 0 : i32
    %c0_i32_0 = arith.constant 0 : i32
    %c0_i32_1 = arith.constant 0 : i32
    return %c0_i32, %c0_i32_0 : i32, i32
  }
  func.func @transform_7(%arg0: i32) -> (i32, i32) {
    %c0_i32 = arith.constant 0 : i32
    %c0_i32_0 = arith.constant 0 : i32
    return %arg0, %c0_i32 : i32, i32
  }
}

</mosaic_0001>

<llo_original>
// kernel: tpu_custom_call.1
$region0: #{tpu_custom_call.1}
  #allocation0 [shape = 'u32[]', space=smem, size = 0x4, offset = 0x4, fixed_abs, tag = 'smem constant byte address 0x4 - core index']
  #allocation1 [shape = 'u32[144,128]{1,0:T(1,128)}', space=vmem, size = 0x12000, scoped, tag = 'internal scratch']
  %s0 = inlined_call_operand.hbm [shape: f32[8,512], index: 0, kind: input, shape index: {}]
  %s1 = inlined_call_operand.hbm [shape: f32[512,256], index: 1, kind: input, shape index: {}]
  %s2 = inlined_call_operand.vmem [shape: f32[1,256], index: 2, kind: input, shape index: {}]
  %s3 = inlined_call_operand.hbm [shape: f32[256,256], index: 3, kind: input, shape index: {}]
  %s4 = inlined_call_operand.hbm [shape: f32[1,256], index: 4, kind: input, shape index: {}]
  %s5 = inlined_call_operand.hbm [shape: f32[256,512], index: 5, kind: input, shape index: {}]
  %s6 = inlined_call_operand.vmem [shape: f32[1,512], index: 6, kind: input, shape index: {}]
  %s7 = inlined_call_operand.hbm [shape: f32[8,512], index: 7, kind: output, shape index: {}]
  %s8 = sld [smem:[#allocation0]]
  $region58: #{tpu_custom_call.1} parent=0
    _
  %s10 = ssub.s32 1, %s8
  %s11 = scalar_select 0, %s10, %s8
  $region1: #{tpu_custom_call.1} parent=0
    #allocation2 [shape = 'u8[16384]{0}', space=vmem, size = 0x4000, scoped, tag = 'input window, operand 0, single buffered']
    #allocation3 [shape = 's32[1]{0}', space=sflag, size = 0x4, scoped, tag = 'scoped memory for tpu_custom_call.1']
    #allocation4 [shape = 's32[1]{0}', space=sflag, size = 0x4, scoped, tag = 'scoped memory for tpu_custom_call.1']
    #allocation5 [shape = 'u8[524288]{0}', space=vmem, size = 0x80000, scoped, tag = 'input window, operand 1, single buffered']
    #allocation6 [shape = 's32[1]{0}', space=sflag, size = 0x4, scoped, tag = 'scoped memory for tpu_custom_call.1']
    #allocation7 [shape = 'u8[262144]{0}', space=vmem, size = 0x40000, scoped, tag = 'input window, operand 3, single buffered']
    #allocation8 [shape = 'u8[1024]{0}', space=vmem, size = 0x400, scoped, tag = 'input window, operand 4, single buffered']
    #allocation9 [shape = 's32[1]{0}', space=sflag, size = 0x4, scoped, tag = 'scoped memory for tpu_custom_call.1']
    #allocation10 [shape = 'u8[524288]{0}', space=vmem, size = 0x80000, scoped, tag = 'input window, operand 5, single buffered']
    #allocation11 [shape = 'u8[16384]{0}', space=vmem, size = 0x4000, scoped, tag = 'output window, operand 0, single buffered']
    %12 = vsyncpa [#allocation3], 0
    %13 = vsyncpa [#allocation6], 0
    %14 = vsyncpa [#allocation9], 0
    %15 = vsyncpa [#allocation4], 0
    // Predicated region
    $region2: #{tpu_custom_call.1} parent=1 // pred_check
      _
    $region3: #{tpu_custom_call.1} parent=1 // pred_check_branch
      %17 = sbr.rel (0) target = $region5
    $region4: #{tpu_custom_call.1} parent=1 // pred_region
      %s19 = ssub.s32 512, 512
      %20 = vsyncadd [#allocation3], %s19
      %s22 = sshll.u32 [#allocation2], 4
      %s23 = int_to_ptr.vmem [resolvable:$true] %s22
      %25 = dma.hbm_to_vmem [thread:$0]  %s0, 512, %s23, [#allocation3]
    $region5: #{tpu_custom_call.1} parent=1 // pred_fallthru
      _
    // Predicated region
    $region6: #{tpu_custom_call.1} parent=1 // pred_check
      _
    $region7: #{tpu_custom_call.1} parent=1 // pred_check_branch
      %27 = sbr.rel (0) target = $region9
    $region8: #{tpu_custom_call.1} parent=1 // pred_region
      %s29 = ssub.s32 16384, 16384
      %30 = vsyncadd [#allocation6], %s29
      %s31 = sshll.u32 [#allocation5], 4
      %s32 = int_to_ptr.vmem [resolvable:$true] %s31
      %37 = dma.hbm_to_vmem [thread:$0]  %s1, 16384, %s32, [#allocation6], 256, 256, 16
    $region9: #{tpu_custom_call.1} parent=1 // pred_fallthru
      _
    // Predicated region
    $region10: #{tpu_custom_call.1} parent=1 // pred_check
      _
    $region11: #{tpu_custom_call.1} parent=1 // pred_check_branch
      %39 = sbr.rel (0) target = $region13
    $region12: #{tpu_custom_call.1} parent=1 // pred_region
      _
    $region13: #{tpu_custom_call.1} parent=1 // pred_fallthru
      _
    // Predicated region
    $region14: #{tpu_custom_call.1} parent=1 // pred_check
      _
    $region15: #{tpu_custom_call.1} parent=1 // pred_check_branch
      %41 = sbr.rel (0) target = $region17
    $region16: #{tpu_custom_call.1} parent=1 // pred_region
      %s43 = ssub.s32 8192, 8192
      %44 = vsyncadd [#allocation6], %s43
      %s45 = sshll.u32 [#allocation7], 4
      %s46 = int_to_ptr.vmem [resolvable:$true] %s45
      %51 = dma.hbm_to_vmem [thread:$0]  %s3, 8192, %s46, [#allocation6], 256, 256, 16
    $region17: #{tpu_custom_call.1} parent=1 // pred_fallthru
      _
    // Predicated region
    $region18: #{tpu_custom_call.1} parent=1 // pred_check
      _
    $region19: #{tpu_custom_call.1} parent=1 // pred_check_branch
      %53 = sbr.rel (0) target = $region21
    $region20: #{tpu_custom_call.1} parent=1 // pred_region
      %s55 = ssub.s32 32, 32
      %56 = vsyncadd [#allocation9], %s55
      %s58 = sshll.u32 [#allocation8], 4
      %s59 = int_to_ptr.vmem [resolvable:$true] %s58
      %61 = dma.hbm_to_vmem [thread:$0]  %s4, 32, %s59, [#allocation9]
    $region21: #{tpu_custom_call.1} parent=1 // pred_fallthru
      _
    // Predicated region
    $region22: #{tpu_custom_call.1} parent=1 // pred_check
      _
    $region23: #{tpu_custom_call.1} parent=1 // pred_check_branch
      %63 = sbr.rel (0) target = $region25
    $region24: #{tpu_custom_call.1} parent=1 // pred_region
      %s65 = ssub.s32 16384, 16384
      %66 = vsyncadd [#allocation9], %s65
      %s67 = sshll.u32 [#allocation10], 4
      %s68 = int_to_ptr.vmem [resolvable:$true] %s67
      %73 = dma.hbm_to_vmem [thread:$0]  %s5, 16384, %s68, [#allocation9], 512, 512, 32
    $region25: #{tpu_custom_call.1} parent=1 // pred_fallthru
      _
    // Predicated region
    $region26: #{tpu_custom_call.1} parent=1 // pred_check
      _
    $region27: #{tpu_custom_call.1} parent=1 // pred_check_branch
      %75 = sbr.rel (0) target = $region29
    $region28: #{tpu_custom_call.1} parent=1 // pred_region
      _
    $region29: #{tpu_custom_call.1} parent=1 // pred_fallthru
      _
    // Predicated region
    $region30: #{tpu_custom_call.1} parent=1 // pred_check
      _
    $region31: #{tpu_custom_call.1} parent=1 // pred_check_branch
      %77 = sbr.rel (0) target = $region33
    $region32: #{tpu_custom_call.1} parent=1 // pred_region
      %78 = dma.done [#allocation3], 512
    $region33: #{tpu_custom_call.1} parent=1 // pred_fallthru
      _
    // Predicated region
    $region34: #{tpu_custom_call.1} parent=1 // pred_check
      _
    $region35: #{tpu_custom_call.1} parent=1 // pred_check_branch
      %80 = sbr.rel (0) target = $region37
    $region36: #{tpu_custom_call.1} parent=1 // pred_region
      %81 = dma.done [#allocation6], 16384
    $region37: #{tpu_custom_call.1} parent=1 // pred_fallthru
      _
    // Predicated region
    $region38: #{tpu_custom_call.1} parent=1 // pred_check
      _
    $region39: #{tpu_custom_call.1} parent=1 // pred_check_branch
      %83 = sbr.rel (0) target = $region41
    $region40: #{tpu_custom_call.1} parent=1 // pred_region
      %84 = dma.done [#allocation6], 8192
    $region41: #{tpu_custom_call.1} parent=1 // pred_fallthru
      _
    // Predicated region
    $region42: #{tpu_custom_call.1} parent=1 // pred_check
      _
    $region43: #{tpu_custom_call.1} parent=1 // pred_check_branch
      %86 = sbr.rel (0) target = $region45
    $region44: #{tpu_custom_call.1} parent=1 // pred_region
      %87 = dma.done [#allocation9], 32
    $region45: #{tpu_custom_call.1} parent=1 // pred_fallthru
      _
    // Predicated region
    $region46: #{tpu_custom_call.1} parent=1 // pred_check
      _
    $region47: #{tpu_custom_call.1} parent=1 // pred_check_branch
      %89 = sbr.rel (0) target = $region49
    $region48: #{tpu_custom_call.1} parent=1 // pred_region
      %90 = dma.done [#allocation9], 16384
    $region49: #{tpu_custom_call.1} parent=1 // pred_fallthru
      _
    %v91 = vld [vmem:[#allocation2] sm:$0xff]
    %v92 = vld [vmem:[#allocation2 + $0x8] sm:$0xff]
    %v93 = vld [vmem:[#allocation2 + $0x10] sm:$0xff]
    %v94 = vld [vmem:[#allocation2 + $0x18] sm:$0xff]
    %v95 = vld [vmem:[#allocation5] sm:$0xff]
    %v96 = vld [vmem:[#allocation5 + $0x8] sm:$0xff]
    %v97 = vld [vmem:[#allocation5 + $0x10] sm:$0xff]
    %v98 = vld [vmem:[#allocation5 + $0x18] sm:$0xff]
    %v99 = vld [vmem:[#allocation5 + $0x20] sm:$0xff]
    %v100 = vld [vmem:[#allocation5 + $0x28] sm:$0xff]
    %v101 = vld [vmem:[#allocation5 + $0x30] sm:$0xff]
    %v102 = vld [vmem:[#allocation5 + $0x38] sm:$0xff]
    %v103 = vld [vmem:[#allocation5 + $0x40] sm:$0xff]
    %v104 = vld [vmem:[#allocation5 + $0x48] sm:$0xff]
    %v105 = vld [vmem:[#allocation5 + $0x50] sm:$0xff]
    %v106 = vld [vmem:[#allocation5 + $0x58] sm:$0xff]
    %v107 = vld [vmem:[#allocation5 + $0x60] sm:$0xff]
    %v108 = vld [vmem:[#allocation5 + $0x68] sm:$0xff]
    %v109 = vld [vmem:[#allocation5 + $0x70] sm:$0xff]
    %v110 = vld [vmem:[#allocation5 + $0x78] sm:$0xff]
    %v111 = vld [vmem:[#allocation5 + $0x80] sm:$0xff]
    %v112 = vld [vmem:[#allocation5 + $0x88] sm:$0xff]
    %v113 = vld [vmem:[#allocation5 + $0x90] sm:$0xff]
    %v114 = vld [vmem:[#allocation5 + $0x98] sm:$0xff]
    %v115 = vld [vmem:[#allocation5 + $0xa0] sm:$0xff]
    %v116 = vld [vmem:[#allocation5 + $0xa8] sm:$0xff]
    %v117 = vld [vmem:[#allocation5 + $0xb0] sm:$0xff]
    %v118 = vld [vmem:[#allocation5 + $0xb8] sm:$0xff]
    %v119 = vld [vmem:[#allocation5 + $0xc0] sm:$0xff]
    %v120 = vld [vmem:[#allocation5 + $0xc8] sm:$0xff]
    %v121 = vld [vmem:[#allocation5 + $0xd0] sm:$0xff]
    %v122 = vld [vmem:[#allocation5 + $0xd8] sm:$0xff]
    %v123 = vld [vmem:[#allocation5 + $0xe0] sm:$0xff]
    %v124 = vld [vmem:[#allocation5 + $0xe8] sm:$0xff]
    %v125 = vld [vmem:[#allocation5 + $0xf0] sm:$0xff]
    %v126 = vld [vmem:[#allocation5 + $0xf8] sm:$0xff]
    %v127 = vld [vmem:[#allocation5 + $0x100] sm:$0xff]
    %v128 = vld [vmem:[#allocation5 + $0x108] sm:$0xff]
    %v129 = vld [vmem:[#allocation5 + $0x110] sm:$0xff]
    %v130 = vld [vmem:[#allocation5 + $0x118] sm:$0xff]
    %v131 = vld [vmem:[#allocation5 + $0x120] sm:$0xff]
    %v132 = vld [vmem:[#allocation5 + $0x128] sm:$0xff]
    %v133 = vld [vmem:[#allocation5 + $0x130] sm:$0xff]
    %v134 = vld [vmem:[#allocation5 + $0x138] sm:$0xff]
    %v135 = vld [vmem:[#allocation5 + $0x140] sm:$0xff]
    %v136 = vld [vmem:[#allocation5 + $0x148] sm:$0xff]
    %v137 = vld [vmem:[#allocation5 + $0x150] sm:$0xff]
    %v138 = vld [vmem:[#allocation5 + $0x158] sm:$0xff]
    %v139 = vld [vmem:[#allocation5 + $0x160] sm:$0xff]
    %v140 = vld [vmem:[#allocation5 + $0x168] sm:$0xff]
    %v141 = vld [vmem:[#allocation5 + $0x170] sm:$0xff]
    %v142 = vld [vmem:[#allocation5 + $0x178] sm:$0xff]
    %v143 = vld [vmem:[#allocation5 + $0x180] sm:$0xff]
    %v144 = vld [vmem:[#allocation5 + $0x188] sm:$0xff]
    %v145 = vld [vmem:[#allocation5 + $0x190] sm:$0xff]
    %v146 = vld [vmem:[#allocation5 + $0x198] sm:$0xff]
    %v147 = vld [vmem:[#allocation5 + $0x1a0] sm:$0xff]
    %v148 = vld [vmem:[#allocation5 + $0x1a8] sm:$0xff]
    %v149 = vld [vmem:[#allocation5 + $0x1b0] sm:$0xff]
    %v150 = vld [vmem:[#allocation5 + $0x1b8] sm:$0xff]
    %v151 = vld [vmem:[#allocation5 + $0x1c0] sm:$0xff]
    %v152 = vld [vmem:[#allocation5 + $0x1c8] sm:$0xff]
    %v153 = vld [vmem:[#allocation5 + $0x1d0] sm:$0xff]
    %v154 = vld [vmem:[#allocation5 + $0x1d8] sm:$0xff]
    %v155 = vld [vmem:[#allocation5 + $0x1e0] sm:$0xff]
    %v156 = vld [vmem:[#allocation5 + $0x1e8] sm:$0xff]
    %v157 = vld [vmem:[#allocation5 + $0x1f0] sm:$0xff]
    %v158 = vld [vmem:[#allocation5 + $0x1f8] sm:$0xff]
    %v159 = vld [vmem:[#allocation5 + $0x200] sm:$0xff]
    %v160 = vld [vmem:[#allocation5 + $0x208] sm:$0xff]
    %v161 = vld [vmem:[#allocation5 + $0x210] sm:$0xff]
    %v162 = vld [vmem:[#allocation5 + $0x218] sm:$0xff]
    %v163 = vld [vmem:[#allocation5 + $0x220] sm:$0xff]
    %v164 = vld [vmem:[#allocation5 + $0x228] sm:$0xff]
    %v165 = vld [vmem:[#allocation5 + $0x230] sm:$0xff]
    %v166 = vld [vmem:[#allocation5 + $0x238] sm:$0xff]
    %v167 = vld [vmem:[#allocation5 + $0x240] sm:$0xff]
    %v168 = vld [vmem:[#allocation5 + $0x248] sm:$0xff]
    %v169 = vld [vmem:[#allocation5 + $0x250] sm:$0xff]
    %v170 = vld [vmem:[#allocation5 + $0x258] sm:$0xff]
    %v171 = vld [vmem:[#allocation5 + $0x260] sm:$0xff]
    %v172 = vld [vmem:[#allocation5 + $0x268] sm:$0xff]
    %v173 = vld [vmem:[#allocation5 + $0x270] sm:$0xff]
    %v174 = vld [vmem:[#allocation5 + $0x278] sm:$0xff]
    %v175 = vld [vmem:[#allocation5 + $0x280] sm:$0xff]
    %v176 = vld [vmem:[#allocation5 + $0x288] sm:$0xff]
    %v177 = vld [vmem:[#allocation5 + $0x290] sm:$0xff]
    %v178 = vld [vmem:[#allocation5 + $0x298] sm:$0xff]
    %v179 = vld [vmem:[#allocation5 + $0x2a0] sm:$0xff]
    %v180 = vld [vmem:[#allocation5 + $0x2a8] sm:$0xff]
    %v181 = vld [vmem:[#allocation5 + $0x2b0] sm:$0xff]
    %v182 = vld [vmem:[#allocation5 + $0x2b8] sm:$0xff]
    %v183 = vld [vmem:[#allocation5 + $0x2c0] sm:$0xff]
    %v184 = vld [vmem:[#allocation5 + $0x2c8] sm:$0xff]
    %v185 = vld [vmem:[#allocation5 + $0x2d0] sm:$0xff]
    %v186 = vld [vmem:[#allocation5 + $0x2d8] sm:$0xff]
    %v187 = vld [vmem:[#allocation5 + $0x2e0] sm:$0xff]
    %v188 = vld [vmem:[#allocation5 + $0x2e8] sm:$0xff]
    %v189 = vld [vmem:[#allocation5 + $0x2f0] sm:$0xff]
    %v190 = vld [vmem:[#allocation5 + $0x2f8] sm:$0xff]
    %v191 = vld [vmem:[#allocation5 + $0x300] sm:$0xff]
    %v192 = vld [vmem:[#allocation5 + $0x308] sm:$0xff]
    %v193 = vld [vmem:[#allocation5 + $0x310] sm:$0xff]
    %v194 = vld [vmem:[#allocation5 + $0x318] sm:$0xff]
    %v195 = vld [vmem:[#allocation5 + $0x320] sm:$0xff]
    %v196 = vld [vmem:[#allocation5 + $0x328] sm:$0xff]
    %v197 = vld [vmem:[#allocation5 + $0x330] sm:$0xff]
    %v198 = vld [vmem:[#allocation5 + $0x338] sm:$0xff]
    %v199 = vld [vmem:[#allocation5 + $0x340] sm:$0xff]
    %v200 = vld [vmem:[#allocation5 + $0x348] sm:$0xff]
    %v201 = vld [vmem:[#allocation5 + $0x350] sm:$0xff]
    %v202 = vld [vmem:[#allocation5 + $0x358] sm:$0xff]
    %v203 = vld [vmem:[#allocation5 + $0x360] sm:$0xff]
    %v204 = vld [vmem:[#allocation5 + $0x368] sm:$0xff]
    %v205 = vld [vmem:[#allocation5 + $0x370] sm:$0xff]
    %v206 = vld [vmem:[#allocation5 + $0x378] sm:$0xff]
    %v207 = vld [vmem:[#allocation5 + $0x380] sm:$0xff]
    %v208 = vld [vmem:[#allocation5 + $0x388] sm:$0xff]
    %v209 = vld [vmem:[#allocation5 + $0x390] sm:$0xff]
    %v210 = vld [vmem:[#allocation5 + $0x398] sm:$0xff]
    %v211 = vld [vmem:[#allocation5 + $0x3a0] sm:$0xff]
    %v212 = vld [vmem:[#allocation5 + $0x3a8] sm:$0xff]
    %v213 = vld [vmem:[#allocation5 + $0x3b0] sm:$0xff]
    %v214 = vld [vmem:[#allocation5 + $0x3b8] sm:$0xff]
    %v215 = vld [vmem:[#allocation5 + $0x3c0] sm:$0xff]
    %v216 = vld [vmem:[#allocation5 + $0x3c8] sm:$0xff]
    %v217 = vld [vmem:[#allocation5 + $0x3d0] sm:$0xff]
    %v218 = vld [vmem:[#allocation5 + $0x3d8] sm:$0xff]
    %v219 = vld [vmem:[#allocation5 + $0x3e0] sm:$0xff]
    %v220 = vld [vmem:[#allocation5 + $0x3e8] sm:$0xff]
    %v221 = vld [vmem:[#allocation5 + $0x3f0] sm:$0xff]
    %v222 = vld [vmem:[#allocation5 + $0x3f8] sm:$0xff]
    %v223 = vld [vmem:[%s2] sm:$0x3]
    %v225 = vlaneseq
    %v226 = vshrl.u32 %v225, 7
    %v227 = vsub.s32 0, %v226
    %v228 = vrot.slane %v223, %v227
    %v229 = vlaneseq
    %v230 = vshrl.u32 %v229, 7
    %v231 = vsub.s32 1, %v230
    %v232 = vrot.slane %v223, %v231
    %235 = vmatprep.subr.mxu0 %v126
    %236 = vmatpush1.msra.mxu0 %v125
    %237 = vmatprep.subr.mxu0 %v124
    %238 = vmatpush1.msra.mxu0 %v123
    %239 = vmatprep.subr.mxu0 %v122
    %240 = vmatpush1.msra.mxu0 %v121
    %241 = vmatprep.subr.mxu0 %v120
    %242 = vmatpush1.msra.mxu0 %v119
    %243 = vmatprep.subr.mxu0 %v118
    %244 = vmatpush1.msra.mxu0 %v117
    %245 = vmatprep.subr.mxu0 %v116
    %246 = vmatpush1.msra.mxu0 %v115
    %247 = vmatprep.subr.mxu0 %v114
    %248 = vmatpush1.msra.mxu0 %v113
    %249 = vmatprep.subr.mxu0 %v112
    %250 = vmatpush1.msra.mxu0 %v111
    %251 = vmatprep.subr.mxu0 %v110
    %252 = vmatpush1.msra.mxu0 %v109
    %253 = vmatprep.subr.mxu0 %v108
    %254 = vmatpush1.msra.mxu0 %v107
    %255 = vmatprep.subr.mxu0 %v106
    %256 = vmatpush1.msra.mxu0 %v105
    %257 = vmatprep.subr.mxu0 %v104
    %258 = vmatpush1.msra.mxu0 %v103
    %259 = vmatprep.subr.mxu0 %v102
    %260 = vmatpush1.msra.mxu0 %v101
    %261 = vmatprep.subr.mxu0 %v100
    %262 = vmatpush1.msra.mxu0 %v99
    %263 = vmatprep.subr.mxu0 %v98
    %264 = vmatpush1.msra.mxu0 %v97
    %265 = vmatprep.subr.mxu0 %v96
    %266 = vmatpush1.msra.mxu0 %v95
    %267 = vmatprep.subr.mxu0 %v158
    %268 = vmatpush2.msra.mxu0 %v157
    %269 = vmatprep.subr.mxu0 %v156
    %270 = vmatpush2.msra.mxu0 %v155
    %271 = vmatprep.subr.mxu0 %v154
    %272 = vmatpush2.msra.mxu0 %v153
    %273 = vmatprep.subr.mxu0 %v152
    %274 = vmatpush2.msra.mxu0 %v151
    %275 = vmatprep.subr.mxu0 %v150
    %276 = vmatpush2.msra.mxu0 %v149
    %277 = vmatprep.subr.mxu0 %v148
    %278 = vmatpush2.msra.mxu0 %v147
    %279 = vmatprep.subr.mxu0 %v146
    %280 = vmatpush2.msra.mxu0 %v145
    %281 = vmatprep.subr.mxu0 %v144
    %282 = vmatpush2.msra.mxu0 %v143
    %283 = vmatprep.subr.mxu0 %v142
    %284 = vmatpush2.msra.mxu0 %v141
    %285 = vmatprep.subr.mxu0 %v140
    %286 = vmatpush2.msra.mxu0 %v139
    %287 = vmatprep.subr.mxu0 %v138
    %288 = vmatpush2.msra.mxu0 %v137
    %289 = vmatprep.subr.mxu0 %v136
    %290 = vmatpush2.msra.mxu0 %v135
    %291 = vmatprep.subr.mxu0 %v134
    %292 = vmatpush2.msra.mxu0 %v133
    %293 = vmatprep.subr.mxu0 %v132
    %294 = vmatpush2.msra.mxu0 %v131
    %295 = vmatprep.subr.mxu0 %v130
    %296 = vmatpush2.msra.mxu0 %v129
    %297 = vmatprep.subr.mxu0 %v128
    %298 = vmatpush2.msra.mxu0 %v127
    %299 = vmatprep.mubr.f32.mxu0 %v92
    %300 = vmatmul.mubr.f32.gmra.mxu0 %v91
    %v301 = vpop.f32.mrf.mxu0
    %v302 = vadd.f32 %v228, %v301
    %v303 = vpop.f32.mrf.mxu0
    %v304 = vadd.f32 %v232, %v303
    %305 = vdwg.mxu0
    %306 = vmatprep.subr.mxu0 %v190
    %307 = vmatpush1.msra.mxu0 %v189
    %308 = vmatprep.subr.mxu0 %v188
    %309 = vmatpush1.msra.mxu0 %v187
    %310 = vmatprep.subr.mxu0 %v186
    %311 = vmatpush1.msra.mxu0 %v185
    %312 = vmatprep.subr.mxu0 %v184
    %313 = vmatpush1.msra.mxu0 %v183
    %314 = vmatprep.subr.mxu0 %v182
    %315 = vmatpush1.msra.mxu0 %v181
    %316 = vmatprep.subr.mxu0 %v180
    %317 = vmatpush1.msra.mxu0 %v179
    %318 = vmatprep.subr.mxu0 %v178
    %319 = vmatpush1.msra.mxu0 %v177
    %320 = vmatprep.subr.mxu0 %v176
    %321 = vmatpush1.msra.mxu0 %v175
    %322 = vmatprep.subr.mxu0 %v174
    %323 = vmatpush1.msra.mxu0 %v173
    %324 = vmatprep.subr.mxu0 %v172
    %325 = vmatpush1.msra.mxu0 %v171
    %326 = vmatprep.subr.mxu0 %v170
    %327 = vmatpush1.msra.mxu0 %v169
    %328 = vmatprep.subr.mxu0 %v168
    %329 = vmatpush1.msra.mxu0 %v167
    %330 = vmatprep.subr.mxu0 %v166
    %331 = vmatpush1.msra.mxu0 %v165
    %332 = vmatprep.subr.mxu0 %v164
    %333 = vmatpush1.msra.mxu0 %v163
    %334 = vmatprep.subr.mxu0 %v162
    %335 = vmatpush1.msra.mxu0 %v161
    %336 = vmatprep.subr.mxu0 %v160
    %337 = vmatpush1.msra.mxu0 %v159
    %338 = vmatprep.subr.mxu0 %v222
    %339 = vmatpush2.msra.mxu0 %v221
    %340 = vmatprep.subr.mxu0 %v220
    %341 = vmatpush2.msra.mxu0 %v219
    %342 = vmatprep.subr.mxu0 %v218
    %343 = vmatpush2.msra.mxu0 %v217
    %344 = vmatprep.subr.mxu0 %v216
    %345 = vmatpush2.msra.mxu0 %v215
    %346 = vmatprep.subr.mxu0 %v214
    %347 = vmatpush2.msra.mxu0 %v213
    %348 = vmatprep.subr.mxu0 %v212
    %349 = vmatpush2.msra.mxu0 %v211
    %350 = vmatprep.subr.mxu0 %v210
    %351 = vmatpush2.msra.mxu0 %v209
    %352 = vmatprep.subr.mxu0 %v208
    %353 = vmatpush2.msra.mxu0 %v207
    %354 = vmatprep.subr.mxu0 %v206
    %355 = vmatpush2.msra.mxu0 %v205
    %356 = vmatprep.subr.mxu0 %v204
    %357 = vmatpush2.msra.mxu0 %v203
    %358 = vmatprep.subr.mxu0 %v202
    %359 = vmatpush2.msra.mxu0 %v201
    %360 = vmatprep.subr.mxu0 %v200
    %361 = vmatpush2.msra.mxu0 %v199
    %362 = vmatprep.subr.mxu0 %v198
    %363 = vmatpush2.msra.mxu0 %v197
    %364 = vmatprep.subr.mxu0 %v196
    %365 = vmatpush2.msra.mxu0 %v195
    %366 = vmatprep.subr.mxu0 %v194
    %367 = vmatpush2.msra.mxu0 %v193
    %368 = vmatprep.subr.mxu0 %v192
    %369 = vmatpush2.msra.mxu0 %v191
    %370 = vmatprep.mubr.f32.mxu0 %v94
    %371 = vmatmul.mubr.f32.gmra.mxu0 %v93
    %v372 = vpop.f32.mrf.mxu0
    %v373 = vadd.f32 %v302, %v372
    %v374 = vpop.f32.mrf.mxu0
    %v375 = vadd.f32 %v304, %v374
    %376 = vdwg.mxu0
    %v377 = vmax.f32 %v373, 0.0
    %v378 = vmax.f32 %v375, 0.0
    %v379 = vld [vmem:[#allocation7] sm:$0xff]
    %v380 = vld [vmem:[#allocation7 + $0x8] sm:$0xff]
    %v381 = vld [vmem:[#allocation7 + $0x10] sm:$0xff]
    %v382 = vld [vmem:[#allocation7 + $0x18] sm:$0xff]
    %v383 = vld [vmem:[#allocation7 + $0x20] sm:$0xff]
    %v384 = vld [vmem:[#allocation7 + $0x28] sm:$0xff]
    %v385 = vld [vmem:[#allocation7 + $0x30] sm:$0xff]
    %v386 = vld [vmem:[#allocation7 + $0x38] sm:$0xff]
    %v387 = vld [vmem:[#allocation7 + $0x40] sm:$0xff]
    %v388 = vld [vmem:[#allocation7 + $0x48] sm:$0xff]
    %v389 = vld [vmem:[#allocation7 + $0x50] sm:$0xff]
    %v390 = vld [vmem:[#allocation7 + $0x58] sm:$0xff]
    %v391 = vld [vmem:[#allocation7 + $0x60] sm:$0xff]
    %v392 = vld [vmem:[#allocation7 + $0x68] sm:$0xff]
    %v393 = vld [vmem:[#allocation7 + $0x70] sm:$0xff]
    %v394 = vld [vmem:[#allocation7 + $0x78] sm:$0xff]
    %v395 = vld [vmem:[#allocation7 + $0x80] sm:$0xff]
    %v396 = vld [vmem:[#allocation7 + $0x88] sm:$0xff]
    %v397 = vld [vmem:[#allocation7 + $0x90] sm:$0xff]
    %v398 = vld [vmem:[#allocation7 + $0x98] sm:$0xff]
    %v399 = vld [vmem:[#allocation7 + $0xa0] sm:$0xff]
    %v400 = vld [vmem:[#allocation7 + $0xa8] sm:$0xff]
    %v401 = vld [vmem:[#allocation7 + $0xb0] sm:$0xff]
    %v402 = vld [vmem:[#allocation7 + $0xb8] sm:$0xff]
    %v403 = vld [vmem:[#allocation7 + $0xc0] sm:$0xff]
    %v404 = vld [vmem:[#allocation7 + $0xc8] sm:$0xff]
    %v405 = vld [vmem:[#allocation7 + $0xd0] sm:$0xff]
    %v406 = vld [vmem:[#allocation7 + $0xd8] sm:$0xff]
    %v407 = vld [vmem:[#allocation7 + $0xe0] sm:$0xff]
    %v408 = vld [vmem:[#allocation7 + $0xe8] sm:$0xff]
    %v409 = vld [vmem:[#allocation7 + $0xf0] sm:$0xff]
    %v410 = vld [vmem:[#allocation7 + $0xf8] sm:$0xff]
    %v411 = vld [vmem:[#allocation7 + $0x100] sm:$0xff]
    %v412 = vld [vmem:[#allocation7 + $0x108] sm:$0xff]
    %v413 = vld [vmem:[#allocation7 + $0x110] sm:$0xff]
    %v414 = vld [vmem:[#allocation7 + $0x118] sm:$0xff]
    %v415 = vld [vmem:[#allocation7 + $0x120] sm:$0xff]
    %v416 = vld [vmem:[#allocation7 + $0x128] sm:$0xff]
    %v417 = vld [vmem:[#allocation7 + $0x130] sm:$0xff]
    %v418 = vld [vmem:[#allocation7 + $0x138] sm:$0xff]
    %v419 = vld [vmem:[#allocation7 + $0x140] sm:$0xff]
    %v420 = vld [vmem:[#allocation7 + $0x148] sm:$0xff]
    %v421 = vld [vmem:[#allocation7 + $0x150] sm:$0xff]
    %v422 = vld [vmem:[#allocation7 + $0x158] sm:$0xff]
    %v423 = vld [vmem:[#allocation7 + $0x160] sm:$0xff]
    %v424 = vld [vmem:[#allocation7 + $0x168] sm:$0xff]
    %v425 = vld [vmem:[#allocation7 + $0x170] sm:$0xff]
    %v426 = vld [vmem:[#allocation7 + $0x178] sm:$0xff]
    %v427 = vld [vmem:[#allocation7 + $0x180] sm:$0xff]
    %v428 = vld [vmem:[#allocation7 + $0x188] sm:$0xff]
    %v429 = vld [vmem:[#allocation7 + $0x190] sm:$0xff]
    %v430 = vld [vmem:[#allocation7 + $0x198] sm:$0xff]
    %v431 = vld [vmem:[#allocation7 + $0x1a0] sm:$0xff]
    %v432 = vld [vmem:[#allocation7 + $0x1a8] sm:$0xff]
    %v433 = vld [vmem:[#allocation7 + $0x1b0] sm:$0xff]
    %v434 = vld [vmem:[#allocation7 + $0x1b8] sm:$0xff]
    %v435 = vld [vmem:[#allocation7 + $0x1c0] sm:$0xff]
    %v436 = vld [vmem:[#allocation7 + $0x1c8] sm:$0xff]
    %v437 = vld [vmem:[#allocation7 + $0x1d0] sm:$0xff]
    %v438 = vld [vmem:[#allocation7 + $0x1d8] sm:$0xff]
    %v439 = vld [vmem:[#allocation7 + $0x1e0] sm:$0xff]
    %v440 = vld [vmem:[#allocation7 + $0x1e8] sm:$0xff]
    %v441 = vld [vmem:[#allocation7 + $0x1f0] sm:$0xff]
    %v442 = vld [vmem:[#allocation7 + $0x1f8] sm:$0xff]
    %v443 = vld [vmem:[#allocation8] sm:$0x3]
    %v445 = vlaneseq
    %v446 = vshrl.u32 %v445, 7
    %v447 = vsub.s32 0, %v446
    %v448 = vrot.slane %v443, %v447
    %v449 = vlaneseq
    %v450 = vshrl.u32 %v449, 7
    %v451 = vsub.s32 1, %v450
    %v452 = vrot.slane %v443, %v451
    %455 = vmatprep.subr.mxu0 %v410
    %456 = vmatpush1.msra.mxu0 %v409
    %457 = vmatprep.subr.mxu0 %v408
    %458 = vmatpush1.msra.mxu0 %v407
    %459 = vmatprep.subr.mxu0 %v406
    %460 = vmatpush1.msra.mxu0 %v405
    %461 = vmatprep.subr.mxu0 %v404
    %462 = vmatpush1.msra.mxu0 %v403
    %463 = vmatprep.subr.mxu0 %v402
    %464 = vmatpush1.msra.mxu0 %v401
    %465 = vmatprep.subr.mxu0 %v400
    %466 = vmatpush1.msra.mxu0 %v399
    %467 = vmatprep.subr.mxu0 %v398
    %468 = vmatpush1.msra.mxu0 %v397
    %469 = vmatprep.subr.mxu0 %v396
    %470 = vmatpush1.msra.mxu0 %v395
    %471 = vmatprep.subr.mxu0 %v394
    %472 = vmatpush1.msra.mxu0 %v393
    %473 = vmatprep.subr.mxu0 %v392
    %474 = vmatpush1.msra.mxu0 %v391
    %475 = vmatprep.subr.mxu0 %v390
    %476 = vmatpush1.msra.mxu0 %v389
    %477 = vmatprep.subr.mxu0 %v388
    %478 = vmatpush1.msra.mxu0 %v387
    %479 = vmatprep.subr.mxu0 %v386
    %480 = vmatpush1.msra.mxu0 %v385
    %481 = vmatprep.subr.mxu0 %v384
    %482 = vmatpush1.msra.mxu0 %v383
    %483 = vmatprep.subr.mxu0 %v382
    %484 = vmatpush1.msra.mxu0 %v381
    %485 = vmatprep.subr.mxu0 %v380
    %486 = vmatpush1.msra.mxu0 %v379
    %487 = vmatprep.subr.mxu0 %v442
    %488 = vmatpush2.msra.mxu0 %v441
    %489 = vmatprep.subr.mxu0 %v440
    %490 = vmatpush2.msra.mxu0 %v439
    %491 = vmatprep.subr.mxu0 %v438
    %492 = vmatpush2.msra.mxu0 %v437
    %493 = vmatprep.subr.mxu0 %v436
    %494 = vmatpush2.msra.mxu0 %v435
    %495 = vmatprep.subr.mxu0 %v434
    %496 = vmatpush2.msra.mxu0 %v433
    %497 = vmatprep.subr.mxu0 %v432
    %498 = vmatpush2.msra.mxu0 %v431
    %499 = vmatprep.subr.mxu0 %v430
    %500 = vmatpush2.msra.mxu0 %v429
    %501 = vmatprep.subr.mxu0 %v428
    %502 = vmatpush2.msra.mxu0 %v427
    %503 = vmatprep.subr.mxu0 %v426
    %504 = vmatpush2.msra.mxu0 %v425
    %505 = vmatprep.subr.mxu0 %v424
    %506 = vmatpush2.msra.mxu0 %v423
    %507 = vmatprep.subr.mxu0 %v422
    %508 = vmatpush2.msra.mxu0 %v421
    %509 = vmatprep.subr.mxu0 %v420
    %510 = vmatpush2.msra.mxu0 %v419
    %511 = vmatprep.subr.mxu0 %v418
    %512 = vmatpush2.msra.mxu0 %v417
    %513 = vmatprep.subr.mxu0 %v416
    %514 = vmatpush2.msra.mxu0 %v415
    %515 = vmatprep.subr.mxu0 %v414
    %516 = vmatpush2.msra.mxu0 %v413
    %517 = vmatprep.subr.mxu0 %v412
    %518 = vmatpush2.msra.mxu0 %v411
    %519 = vmatprep.mubr.f32.mxu0 %v378
    %520 = vmatmul.mubr.f32.gmra.mxu0 %v377
    %v521 = vpop.f32.mrf.mxu0
    %v522 = vadd.f32 %v448, %v521
    %v523 = vpop.f32.mrf.mxu0
    %v524 = vadd.f32 %v452, %v523
    %525 = vdwg.mxu0
    %v526 = vmax.f32 %v522, 0.0
    %v527 = vmax.f32 %v524, 0.0
    %v528 = vld [vmem:[#allocation10] sm:$0xff]
    %v529 = vld [vmem:[#allocation10 + $0x8] sm:$0xff]
    %v530 = vld [vmem:[#allocation10 + $0x10] sm:$0xff]
    %v531 = vld [vmem:[#allocation10 + $0x18] sm:$0xff]
    %v532 = vld [vmem:[#allocation10 + $0x20] sm:$0xff]
    %v533 = vld [vmem:[#allocation10 + $0x28] sm:$0xff]
    %v534 = vld [vmem:[#allocation10 + $0x30] sm:$0xff]
    %v535 = vld [vmem:[#allocation10 + $0x38] sm:$0xff]
    %v536 = vld [vmem:[#allocation10 + $0x40] sm:$0xff]
    %v537 = vld [vmem:[#allocation10 + $0x48] sm:$0xff]
    %v538 = vld [vmem:[#allocation10 + $0x50] sm:$0xff]
    %v539 = vld [vmem:[#allocation10 + $0x58] sm:$0xff]
    %v540 = vld [vmem:[#allocation10 + $0x60] sm:$0xff]
    %v541 = vld [vmem:[#allocation10 + $0x68] sm:$0xff]
    %v542 = vld [vmem:[#allocation10 + $0x70] sm:$0xff]
    %v543 = vld [vmem:[#allocation10 + $0x78] sm:$0xff]
    %v544 = vld [vmem:[#allocation10 + $0x80] sm:$0xff]
    %v545 = vld [vmem:[#allocation10 + $0x88] sm:$0xff]
    %v546 = vld [vmem:[#allocation10 + $0x90] sm:$0xff]
    %v547 = vld [vmem:[#allocation10 + $0x98] sm:$0xff]
    %v548 = vld [vmem:[#allocation10 + $0xa0] sm:$0xff]
    %v549 = vld [vmem:[#allocation10 + $0xa8] sm:$0xff]
    %v550 = vld [vmem:[#allocation10 + $0xb0] sm:$0xff]
    %v551 = vld [vmem:[#allocation10 + $0xb8] sm:$0xff]
    %v552 = vld [vmem:[#allocation10 + $0xc0] sm:$0xff]
    %v553 = vld [vmem:[#allocation10 + $0xc8] sm:$0xff]
    %v554 = vld [vmem:[#allocation10 + $0xd0] sm:$0xff]
    %v555 = vld [vmem:[#allocation10 + $0xd8] sm:$0xff]
    %v556 = vld [vmem:[#allocation10 + $0xe0] sm:$0xff]
    %v557 = vld [vmem:[#allocation10 + $0xe8] sm:$0xff]
    %v558 = vld [vmem:[#allocation10 + $0xf0] sm:$0xff]
    %v559 = vld [vmem:[#allocation10 + $0xf8] sm:$0xff]
    %v560 = vld [vmem:[#allocation10 + $0x100] sm:$0xff]
    %v561 = vld [vmem:[#allocation10 + $0x108] sm:$0xff]
    %v562 = vld [vmem:[#allocation10 + $0x110] sm:$0xff]
    %v563 = vld [vmem:[#allocation10 + $0x118] sm:$0xff]
    %v564 = vld [vmem:[#allocation10 + $0x120] sm:$0xff]
    %v565 = vld [vmem:[#allocation10 + $0x128] sm:$0xff]
    %v566 = vld [vmem:[#allocation10 + $0x130] sm:$0xff]
    %v567 = vld [vmem:[#allocation10 + $0x138] sm:$0xff]
    %v568 = vld [vmem:[#allocation10 + $0x140] sm:$0xff]
    %v569 = vld [vmem:[#allocation10 + $0x148] sm:$0xff]
    %v570 = vld [vmem:[#allocation10 + $0x150] sm:$0xff]
    %v571 = vld [vmem:[#allocation10 + $0x158] sm:$0xff]
    %v572 = vld [vmem:[#allocation10 + $0x160] sm:$0xff]
    %v573 = vld [vmem:[#allocation10 + $0x168] sm:$0xff]
    %v574 = vld [vmem:[#allocation10 + $0x170] sm:$0xff]
    %v575 = vld [vmem:[#allocation10 + $0x178] sm:$0xff]
    %v576 = vld [vmem:[#allocation10 + $0x180] sm:$0xff]
    %v577 = vld [vmem:[#allocation10 + $0x188] sm:$0xff]
    %v578 = vld [vmem:[#allocation10 + $0x190] sm:$0xff]
    %v579 = vld [vmem:[#allocation10 + $0x198] sm:$0xff]
    %v580 = vld [vmem:[#allocation10 + $0x1a0] sm:$0xff]
    %v581 = vld [vmem:[#allocation10 + $0x1a8] sm:$0xff]
    %v582 = vld [vmem:[#allocation10 + $0x1b0] sm:$0xff]
    %v583 = vld [vmem:[#allocation10 + $0x1b8] sm:$0xff]
    %v584 = vld [vmem:[#allocation10 + $0x1c0] sm:$0xff]
    %v585 = vld [vmem:[#allocation10 + $0x1c8] sm:$0xff]
    %v586 = vld [vmem:[#allocation10 + $0x1d0] sm:$0xff]
    %v587 = vld [vmem:[#allocation10 + $0x1d8] sm:$0xff]
    %v588 = vld [vmem:[#allocation10 + $0x1e0] sm:$0xff]
    %v589 = vld [vmem:[#allocation10 + $0x1e8] sm:$0xff]
    %v590 = vld [vmem:[#allocation10 + $0x1f0] sm:$0xff]
    %v591 = vld [vmem:[#allocation10 + $0x1f8] sm:$0xff]
    %v592 = vld [vmem:[#allocation10 + $0x200] sm:$0xff]
    %v593 = vld [vmem:[#allocation10 + $0x208] sm:$0xff]
    %v594 = vld [vmem:[#allocation10 + $0x210] sm:$0xff]
    %v595 = vld [vmem:[#allocation10 + $0x218] sm:$0xff]
    %v596 = vld [vmem:[#allocation10 + $0x220] sm:$0xff]
    %v597 = vld [vmem:[#allocation10 + $0x228] sm:$0xff]
    %v598 = vld [vmem:[#allocation10 + $0x230] sm:$0xff]
    %v599 = vld [vmem:[#allocation10 + $0x238] sm:$0xff]
    %v600 = vld [vmem:[#allocation10 + $0x240] sm:$0xff]
    %v601 = vld [vmem:[#allocation10 + $0x248] sm:$0xff]
    %v602 = vld [vmem:[#allocation10 + $0x250] sm:$0xff]
    %v603 = vld [vmem:[#allocation10 + $0x258] sm:$0xff]
    %v604 = vld [vmem:[#allocation10 + $0x260] sm:$0xff]
    %v605 = vld [vmem:[#allocation10 + $0x268] sm:$0xff]
    %v606 = vld [vmem:[#allocation10 + $0x270] sm:$0xff]
    %v607 = vld [vmem:[#allocation10 + $0x278] sm:$0xff]
    %v608 = vld [vmem:[#allocation10 + $0x280] sm:$0xff]
    %v609 = vld [vmem:[#allocation10 + $0x288] sm:$0xff]
    %v610 = vld [vmem:[#allocation10 + $0x290] sm:$0xff]
    %v611 = vld [vmem:[#allocation10 + $0x298] sm:$0xff]
    %v612 = vld [vmem:[#allocation10 + $0x2a0] sm:$0xff]
    %v613 = vld [vmem:[#allocation10 + $0x2a8] sm:$0xff]
    %v614 = vld [vmem:[#allocation10 + $0x2b0] sm:$0xff]
    %v615 = vld [vmem:[#allocation10 + $0x2b8] sm:$0xff]
    %v616 = vld [vmem:[#allocation10 + $0x2c0] sm:$0xff]
    %v617 = vld [vmem:[#allocation10 + $0x2c8] sm:$0xff]
    %v618 = vld [vmem:[#allocation10 + $0x2d0] sm:$0xff]
    %v619 = vld [vmem:[#allocation10 + $0x2d8] sm:$0xff]
    %v620 = vld [vmem:[#allocation10 + $0x2e0] sm:$0xff]
    %v621 = vld [vmem:[#allocation10 + $0x2e8] sm:$0xff]
    %v622 = vld [vmem:[#allocation10 + $0x2f0] sm:$0xff]
    %v623 = vld [vmem:[#allocation10 + $0x2f8] sm:$0xff]
    %v624 = vld [vmem:[#allocation10 + $0x300] sm:$0xff]
    %v625 = vld [vmem:[#allocation10 + $0x308] sm:$0xff]
    %v626 = vld [vmem:[#allocation10 + $0x310] sm:$0xff]
    %v627 = vld [vmem:[#allocation10 + $0x318] sm:$0xff]
    %v628 = vld [vmem:[#allocation10 + $0x320] sm:$0xff]
    %v629 = vld [vmem:[#allocation10 + $0x328] sm:$0xff]
    %v630 = vld [vmem:[#allocation10 + $0x330] sm:$0xff]
    %v631 = vld [vmem:[#allocation10 + $0x338] sm:$0xff]
    %v632 = vld [vmem:[#allocation10 + $0x340] sm:$0xff]
    %v633 = vld [vmem:[#allocation10 + $0x348] sm:$0xff]
    %v634 = vld [vmem:[#allocation10 + $0x350] sm:$0xff]
    %v635 = vld [vmem:[#allocation10 + $0x358] sm:$0xff]
    %v636 = vld [vmem:[#allocation10 + $0x360] sm:$0xff]
    %v637 = vld [vmem:[#allocation10 + $0x368] sm:$0xff]
    %v638 = vld [vmem:[#allocation10 + $0x370] sm:$0xff]
    %v639 = vld [vmem:[#allocation10 + $0x378] sm:$0xff]
    %v640 = vld [vmem:[#allocation10 + $0x380] sm:$0xff]
    %v641 = vld [vmem:[#allocation10 + $0x388] sm:$0xff]
    %v642 = vld [vmem:[#allocation10 + $0x390] sm:$0xff]
    %v643 = vld [vmem:[#allocation10 + $0x398] sm:$0xff]
    %v644 = vld [vmem:[#allocation10 + $0x3a0] sm:$0xff]
    %v645 = vld [vmem:[#allocation10 + $0x3a8] sm:$0xff]
    %v646 = vld [vmem:[#allocation10 + $0x3b0] sm:$0xff]
    %v647 = vld [vmem:[#allocation10 + $0x3b8] sm:$0xff]
    %v648 = vld [vmem:[#allocation10 + $0x3c0] sm:$0xff]
    %v649 = vld [vmem:[#allocation10 + $0x3c8] sm:$0xff]
    %v650 = vld [vmem:[#allocation10 + $0x3d0] sm:$0xff]
    %v651 = vld [vmem:[#allocation10 + $0x3d8] sm:$0xff]
    %v652 = vld [vmem:[#allocation10 + $0x3e0] sm:$0xff]
    %v653 = vld [vmem:[#allocation10 + $0x3e8] sm:$0xff]
    %v654 = vld [vmem:[#allocation10 + $0x3f0] sm:$0xff]
    %v655 = vld [vmem:[#allocation10 + $0x3f8] sm:$0xff]
    %v656 = vld [vmem:[%s6] sm:$0xf]
    %v658 = vlaneseq
    %v659 = vshrl.u32 %v658, 7
    %v660 = vsub.s32 0, %v659
    %v661 = vrot.slane %v656, %v660
    %v662 = vlaneseq
    %v663 = vshrl.u32 %v662, 7
    %v664 = vsub.s32 1, %v663
    %v665 = vrot.slane %v656, %v664
    %v666 = vlaneseq
    %v667 = vshrl.u32 %v666, 7
    %v668 = vsub.s32 2, %v667
    %v669 = vrot.slane %v656, %v668
    %v670 = vlaneseq
    %v671 = vshrl.u32 %v670, 7
    %v672 = vsub.s32 3, %v671
    %v673 = vrot.slane %v656, %v672
    %678 = vmatprep.subr.mxu0 %v589
    %679 = vmatpush1.msra.mxu0 %v588
    %680 = vmatprep.subr.mxu0 %v585
    %681 = vmatpush1.msra.mxu0 %v584
    %682 = vmatprep.subr.mxu0 %v581
    %683 = vmatpush1.msra.mxu0 %v580
    %684 = vmatprep.subr.mxu0 %v577
    %685 = vmatpush1.msra.mxu0 %v576
    %686 = vmatprep.subr.mxu0 %v573
    %687 = vmatpush1.msra.mxu0 %v572
    %688 = vmatprep.subr.mxu0 %v569
    %689 = vmatpush1.msra.mxu0 %v568
    %690 = vmatprep.subr.mxu0 %v565
    %691 = vmatpush1.msra.mxu0 %v564
    %692 = vmatprep.subr.mxu0 %v561
    %693 = vmatpush1.msra.mxu0 %v560
    %694 = vmatprep.subr.mxu0 %v557
    %695 = vmatpush1.msra.mxu0 %v556
    %696 = vmatprep.subr.mxu0 %v553
    %697 = vmatpush1.msra.mxu0 %v552
    %698 = vmatprep.subr.mxu0 %v549
    %699 = vmatpush1.msra.mxu0 %v548
    %700 = vmatprep.subr.mxu0 %v545
    %701 = vmatpush1.msra.mxu0 %v544
    %702 = vmatprep.subr.mxu0 %v541
    %703 = vmatpush1.msra.mxu0 %v540
    %704 = vmatprep.subr.mxu0 %v537
    %705 = vmatpush1.msra.mxu0 %v536
    %706 = vmatprep.subr.mxu0 %v533
    %707 = vmatpush1.msra.mxu0 %v532
    %708 = vmatprep.subr.mxu0 %v529
    %709 = vmatpush1.msra.mxu0 %v528
    %710 = vmatprep.subr.mxu0 %v653
    %711 = vmatpush2.msra.mxu0 %v652
    %712 = vmatprep.subr.mxu0 %v649
    %713 = vmatpush2.msra.mxu0 %v648
    %714 = vmatprep.subr.mxu0 %v645
    %715 = vmatpush2.msra.mxu0 %v644
    %716 = vmatprep.subr.mxu0 %v641
    %717 = vmatpush2.msra.mxu0 %v640
    %718 = vmatprep.subr.mxu0 %v637
    %719 = vmatpush2.msra.mxu0 %v636
    %720 = vmatprep.subr.mxu0 %v633
    %721 = vmatpush2.msra.mxu0 %v632
    %722 = vmatprep.subr.mxu0 %v629
    %723 = vmatpush2.msra.mxu0 %v628
    %724 = vmatprep.subr.mxu0 %v625
    %725 = vmatpush2.msra.mxu0 %v624
    %726 = vmatprep.subr.mxu0 %v621
    %727 = vmatpush2.msra.mxu0 %v620
    %728 = vmatprep.subr.mxu0 %v617
    %729 = vmatpush2.msra.mxu0 %v616
    %730 = vmatprep.subr.mxu0 %v613
    %731 = vmatpush2.msra.mxu0 %v612
    %732 = vmatprep.subr.mxu0 %v609
    %733 = vmatpush2.msra.mxu0 %v608
    %734 = vmatprep.subr.mxu0 %v605
    %735 = vmatpush2.msra.mxu0 %v604
    %736 = vmatprep.subr.mxu0 %v601
    %737 = vmatpush2.msra.mxu0 %v600
    %738 = vmatprep.subr.mxu0 %v597
    %739 = vmatpush2.msra.mxu0 %v596
    %740 = vmatprep.subr.mxu0 %v593
    %741 = vmatpush2.msra.mxu0 %v592
    %742 = vmatprep.mubr.f32.mxu0 %v527
    %743 = vmatmul.mubr.f32.gmra.mxu0 %v526
    %v744 = vpop.f32.mrf.mxu0
    %v745 = vadd.f32 %v661, %v744
    %v746 = vpop.f32.mrf.mxu0
    %v747 = vadd.f32 %v665, %v746
    %748 = vdwg.mxu0
    %749 = vmatprep.subr.mxu0 %v591
    %750 = vmatpush1.msra.mxu0 %v590
    %751 = vmatprep.subr.mxu0 %v587
    %752 = vmatpush1.msra.mxu0 %v586
    %753 = vmatprep.subr.mxu0 %v583
    %754 = vmatpush1.msra.mxu0 %v582
    %755 = vmatprep.subr.mxu0 %v579
    %756 = vmatpush1.msra.mxu0 %v578
    %757 = vmatprep.subr.mxu0 %v575
    %758 = vmatpush1.msra.mxu0 %v574
    %759 = vmatprep.subr.mxu0 %v571
    %760 = vmatpush1.msra.mxu0 %v570
    %761 = vmatprep.subr.mxu0 %v567
    %762 = vmatpush1.msra.mxu0 %v566
    %763 = vmatprep.subr.mxu0 %v563
    %764 = vmatpush1.msra.mxu0 %v562
    %765 = vmatprep.subr.mxu0 %v559
    %766 = vmatpush1.msra.mxu0 %v558
    %767 = vmatprep.subr.mxu0 %v555
    %768 = vmatpush1.msra.mxu0 %v554
    %769 = vmatprep.subr.mxu0 %v551
    %770 = vmatpush1.msra.mxu0 %v550
    %771 = vmatprep.subr.mxu0 %v547
    %772 = vmatpush1.msra.mxu0 %v546
    %773 = vmatprep.subr.mxu0 %v543
    %774 = vmatpush1.msra.mxu0 %v542
    %775 = vmatprep.subr.mxu0 %v539
    %776 = vmatpush1.msra.mxu0 %v538
    %777 = vmatprep.subr.mxu0 %v535
    %778 = vmatpush1.msra.mxu0 %v534
    %779 = vmatprep.subr.mxu0 %v531
    %780 = vmatpush1.msra.mxu0 %v530
    %781 = vmatprep.subr.mxu0 %v655
    %782 = vmatpush2.msra.mxu0 %v654
    %783 = vmatprep.subr.mxu0 %v651
    %784 = vmatpush2.msra.mxu0 %v650
    %785 = vmatprep.subr.mxu0 %v647
    %786 = vmatpush2.msra.mxu0 %v646
    %787 = vmatprep.subr.mxu0 %v643
    %788 = vmatpush2.msra.mxu0 %v642
    %789 = vmatprep.subr.mxu0 %v639
    %790 = vmatpush2.msra.mxu0 %v638
    %791 = vmatprep.subr.mxu0 %v635
    %792 = vmatpush2.msra.mxu0 %v634
    %793 = vmatprep.subr.mxu0 %v631
    %794 = vmatpush2.msra.mxu0 %v630
    %795 = vmatprep.subr.mxu0 %v627
    %796 = vmatpush2.msra.mxu0 %v626
    %797 = vmatprep.subr.mxu0 %v623
    %798 = vmatpush2.msra.mxu0 %v622
    %799 = vmatprep.subr.mxu0 %v619
    %800 = vmatpush2.msra.mxu0 %v618
    %801 = vmatprep.subr.mxu0 %v615
    %802 = vmatpush2.msra.mxu0 %v614
    %803 = vmatprep.subr.mxu0 %v611
    %804 = vmatpush2.msra.mxu0 %v610
    %805 = vmatprep.subr.mxu0 %v607
    %806 = vmatpush2.msra.mxu0 %v606
    %807 = vmatprep.subr.mxu0 %v603
    %808 = vmatpush2.msra.mxu0 %v602
    %809 = vmatprep.subr.mxu0 %v599
    %810 = vmatpush2.msra.mxu0 %v598
    %811 = vmatprep.subr.mxu0 %v595
    %812 = vmatpush2.msra.mxu0 %v594
    %813 = vmatprep.mubr.f32.mxu0 %v527
    %814 = vmatmul.mubr.f32.gmra.mxu0 %v526
    %v815 = vpop.f32.mrf.mxu0
    %v816 = vadd.f32 %v669, %v815
    %v817 = vpop.f32.mrf.mxu0
    %v818 = vadd.f32 %v673, %v817
    %819 = vdwg.mxu0
    %820 = vst [vmem:[#allocation11] sm:$0xff] %v745
    %821 = vst [vmem:[#allocation11 + $0x8] sm:$0xff] %v747
    %822 = vst [vmem:[#allocation11 + $0x10] sm:$0xff] %v816
    %823 = vst [vmem:[#allocation11 + $0x18] sm:$0xff] %v818
    // Predicated region
    $region50: #{tpu_custom_call.1} parent=1 // pred_check
      _
    $region51: #{tpu_custom_call.1} parent=1 // pred_check_branch
      %825 = sbr.rel (0) target = $region53
    $region52: #{tpu_custom_call.1} parent=1 // pred_region
      %s827 = ssub.s32 512, 512
      %828 = vsyncadd [#allocation4], %s827
      %s830 = sshll.u32 [#allocation11], 4
      %s831 = int_to_ptr.vmem [resolvable:$true] %s830
      %833 = dma.vmem_to_hbm [thread:$0]  %s831, 512, %s7, [#allocation4]
    $region53: #{tpu_custom_call.1} parent=1 // pred_fallthru
      _
    // Predicated region
    $region54: #{tpu_custom_call.1} parent=1 // pred_check
      _
    $region55: #{tpu_custom_call.1} parent=1 // pred_check_branch
      %835 = sbr.rel (0) target = $region57
    $region56: #{tpu_custom_call.1} parent=1 // pred_region
      %836 = dma.done [#allocation4], 512
    $region57: #{tpu_custom_call.1} parent=1 // pred_fallthru
      _
    %837 = vsyncpa [#allocation3], 1
    %838 = vsyncpa [#allocation6], 1
    %839 = vsyncpa [#allocation9], 1
    %840 = vsyncpa [#allocation4], 1

</llo_original>
